<compile_context>
chip_gen: v5e
topology: v5e:2x2
jax: 0.10.0
libtpu: 0.0.40
codegen_flags: <defaults>
</compile_context>

<pallas_src>
import functools

import jax
import jax.numpy as jnp
from jax.experimental import pallas as pl
from jax.experimental.pallas import tpu as pltpu

EPS = 1e-5


# ---------------------------------------------------------------------------
# Fused Pallas kernel: the entire DualG forward.
# ---------------------------------------------------------------------------
def dualg_kernel(a_row_ref, a_col_ref, x_ref, w_ref, vec_ref, wg_ref, o_ref,
                 *, d_real):
    f32 = jnp.float32
    bf16 = jnp.bfloat16
    n, d_pad = x_ref.shape

    # lane mask for the real (unpadded) feature width; hoisted once.
    mask = (jax.lax.broadcasted_iota(jnp.int32, (1, d_pad), 1) < d_real).astype(f32)
    inv_d = 1.0 / d_real

    def v(i):  # one packed (1, d_pad) f32 vector parameter
        return vec_ref[i:i + 1, :]

    def mm(a, b):  # MXU matmul, f32 accumulation
        return jnp.dot(a, b, preferred_element_type=f32)

    def layer_norm(y, gamma, beta):
        # padded lanes of y are zero by construction; stats over the real D only.
        mu = jnp.sum(y * mask, axis=-1, keepdims=True) * inv_d
        c = (y - mu) * mask
        var = jnp.sum(c * c, axis=-1, keepdims=True) * inv_d
        return c * jax.lax.rsqrt(var + EPS) * gamma + beta

    a_row = a_row_ref[...]          # (n, n)      bf16, normalized adjacency
    a_col = a_col_ref[...]          # (n, n)      bf16
    x = x_ref[...]                  # (n, d_pad)  bf16

    # ---- first DG_Interaction layer: two GraphConvs -----------------------
    # feature projections fused into one wide MXU op: X @ [W_row | W_col]
    xw = mm(x, w_ref[:, 0:2 * d_pad]).astype(bf16)            # (n, 2*d_pad)
    row1 = jnp.maximum(mm(a_row, xw[:, :d_pad]) + v(0), 0.0)  # relu(Â_r (XW_r) + b)
    col1 = jnp.maximum(mm(a_col, xw[:, d_pad:]) + v(1), 0.0)

    # ---- graph interaction: support linears + LayerNorm, merge + LayerNorm
    row_s = layer_norm(mm(row1.astype(bf16), w_ref[:, 2 * d_pad:3 * d_pad]) + v(2),
                       v(3), v(4))
    col_s = layer_norm(mm(col1.astype(bf16), w_ref[:, 3 * d_pad:4 * d_pad]) + v(5),
                       v(6), v(7))
    # concat([row_s, col_s]) @ W_m realized as two half-matmuls (no concat needed)
    y_m = (mm(row_s.astype(bf16), w_ref[:, 4 * d_pad:5 * d_pad])
           + mm(col_s.astype(bf16), w_ref[:, 5 * d_pad:6 * d_pad]) + v(8))
    g_rep = layer_norm(y_m, v(9), v(10))

    # ---- final DG_Interaction layer (final_layer=True): two GraphConvs ----
    gw = mm(g_rep.astype(bf16), w_ref[:, 6 * d_pad:8 * d_pad]).astype(bf16)
    row2 = jnp.maximum(mm(a_row, gw[:, :d_pad]) + v(11), 0.0)
    col2 = jnp.maximum(mm(a_col, gw[:, d_pad:]) + v(12), 0.0)

    # ---- AdaptiveFusion: gate scores on the MXU (no sublane concat) -------
    lr = mm(row2.astype(bf16), wg_ref[...])                   # (n, 128); col 0 used
    lc = mm(col2.astype(bf16), wg_ref[...])                   # (n, 128); col 1 used
    a_g = jax.nn.sigmoid(lr[:, 0:1] + vec_ref[13:14, 0:1])
    b_g = jax.nn.sigmoid(lc[:, 1:2] + vec_ref[13:14, 1:2])
    alpha = a_g / (a_g + b_g)
    o_ref[...] = alpha * row2 + (1.0 - alpha) * col2


# ---------------------------------------------------------------------------
# Wrapper glue: adjacency normalization, lane-dense padding, parameter packing.
# ---------------------------------------------------------------------------
def _round_up(x, m):
    return ((x + m - 1) // m) * m


def normalize_adj(adj):
    # symmetric GCN normalization: D^{-1/2} A D^{-1/2}
    deg = jnp.maximum(jnp.sum(adj, axis=1), 1.0)
    dinv = jax.lax.rsqrt(deg)
    return dinv[:, None] * adj * dinv[None, :]


def _pad2(a, rows, cols):
    return jnp.pad(a, ((0, rows - a.shape[0]), (0, cols - a.shape[1])))


def dualg_forward(p, table_feat, row_graph, col_graph):
    n, d = table_feat.shape
    n_pad = _round_up(max(n, 8), 8)
    d_pad = _round_up(max(d, 128), 128)

    a_row = _pad2(normalize_adj(row_graph), n_pad, n_pad).astype(jnp.bfloat16)
    a_col = _pad2(normalize_adj(col_graph), n_pad, n_pad).astype(jnp.bfloat16)
    x = _pad2(table_feat, n_pad, d_pad).astype(jnp.bfloat16)

    def pw(w):  # pad a (d, d) weight to (d_pad, d_pad) with zeros
        return _pad2(w, d_pad, d_pad)

    # packed bf16 weight slab:
    # [W_row1 | W_col1 | W_rs | W_cs | W_mr | W_mc | W_row2 | W_col2]
    w_pack = jnp.concatenate([
        pw(p["l1_row_w"]), pw(p["l1_col_w"]),
        pw(p["l1_rs_w"]), pw(p["l1_cs_w"]),
        pw(p["l1_m_w"][:d, :]), pw(p["l1_m_w"][d:, :]),
        pw(p["l2_row_w"]), pw(p["l2_col_w"]),
    ], axis=1).astype(jnp.bfloat16)                           # (d_pad, 8*d_pad)

    def pv(vv):  # pad a (d,) vector to a (1, d_pad) row
        return jnp.pad(vv.reshape(1, -1), ((0, 0), (0, d_pad - vv.shape[-1])))

    # gate biases live in lanes 0/1 of the last packed vector row
    gate_row = jnp.zeros((1, d_pad), jnp.float32)
    gate_row = gate_row.at[0, 0].set(p["af_b1"]).at[0, 1].set(p["af_b2"])

    # packed f32 vector slab (14, d_pad): biases / gammas / betas / gate biases
    vec_pack = jnp.concatenate([
        pv(p["l1_row_b"]), pv(p["l1_col_b"]),
        pv(p["l1_rs_b"]), pv(p["l1_rs_g"]), pv(p["l1_rs_be"]),
        pv(p["l1_cs_b"]), pv(p["l1_cs_g"]), pv(p["l1_cs_be"]),
        pv(p["l1_m_b"]), pv(p["l1_m_g"]), pv(p["l1_m_be"]),
        pv(p["l2_row_b"]), pv(p["l2_col_b"]),
        gate_row,
    ], axis=0).astype(jnp.float32)

    # fusion gate weights packed as lane-dense (d_pad, 128), cols 0/1 meaningful
    wg = jnp.pad(jnp.stack([p["af_w1"], p["af_w2"]], axis=1),
                 ((0, d_pad - d), (0, 128 - 2))).astype(jnp.bfloat16)

    vmem = pl.BlockSpec(memory_space=pltpu.MemorySpace.VMEM)

    out = pl.pallas_call(
        functools.partial(dualg_kernel, d_real=d),
        out_shape=jax.ShapeDtypeStruct((n_pad, d_pad), jnp.float32),
        in_specs=[vmem, vmem, vmem, vmem, vmem, vmem],
        out_specs=vmem,
        compiler_params=pltpu.CompilerParams(vmem_limit_bytes=32 * 1024 * 1024),
    )(a_row, a_col, x, w_pack, vec_pack, wg)
    return out[:n, :d]


# ---------------------------------------------------------------------------
# Parameters + pure-JAX f32 reference (for a loose correctness check).
# ---------------------------------------------------------------------------
def init_params(key, d):
    ks = jax.random.split(key, 18)
    s = 0.1
    mat = lambda k, fin, fout: s * jax.random.normal(k, (fin, fout), jnp.float32)
    vec = lambda k, f: s * jax.random.normal(k, (f,), jnp.float32)
    ones = jnp.ones((d,), jnp.float32)
    zeros = jnp.zeros((d,), jnp.float32)
    return {
        "l1_row_w": mat(ks[0], d, d), "l1_row_b": vec(ks[1], d),
        "l1_col_w": mat(ks[2], d, d), "l1_col_b": vec(ks[3], d),
        "l1_rs_w": mat(ks[4], d, d), "l1_rs_b": vec(ks[5], d),
        "l1_rs_g": ones, "l1_rs_be": zeros,
        "l1_cs_w": mat(ks[6], d, d), "l1_cs_b": vec(ks[7], d),
        "l1_cs_g": ones, "l1_cs_be": zeros,
        "l1_m_w": mat(ks[8], 2 * d, d), "l1_m_b": vec(ks[9], d),
        "l1_m_g": ones, "l1_m_be": zeros,
        "l2_row_w": mat(ks[10], d, d), "l2_row_b": vec(ks[11], d),
        "l2_col_w": mat(ks[12], d, d), "l2_col_b": vec(ks[13], d),
        "af_w1": vec(ks[14], d), "af_b1": s * jax.random.normal(ks[15], (), jnp.float32),
        "af_w2": vec(ks[16], d), "af_b2": s * jax.random.normal(ks[17], (), jnp.float32),
    }


def dualg_reference(p, table_feat, row_graph, col_graph):
    a_row = normalize_adj(row_graph)
    a_col = normalize_adj(col_graph)

    def gconv(a, x, w, b):
        return jax.nn.relu(a @ (x @ w) + b[None, :])

    def ln(y, g, be):
        mu = jnp.mean(y, axis=-1, keepdims=True)
        var = jnp.mean((y - mu) ** 2, axis=-1, keepdims=True)
        return (y - mu) * jax.lax.rsqrt(var + EPS) * g[None, :] + be[None, :]

    row1 = gconv(a_row, table_feat, p["l1_row_w"], p["l1_row_b"])
    col1 = gconv(a_col, table_feat, p["l1_col_w"], p["l1_col_b"])
    row_s = ln(row1 @ p["l1_rs_w"] + p["l1_rs_b"][None, :], p["l1_rs_g"], p["l1_rs_be"])
    col_s = ln(col1 @ p["l1_cs_w"] + p["l1_cs_b"][None, :], p["l1_cs_g"], p["l1_cs_be"])
    g_rep = ln(jnp.concatenate([row_s, col_s], axis=1) @ p["l1_m_w"]
               + p["l1_m_b"][None, :], p["l1_m_g"], p["l1_m_be"])
    row2 = gconv(a_row, g_rep, p["l2_row_w"], p["l2_row_b"])
    col2 = gconv(a_col, g_rep, p["l2_col_w"], p["l2_col_b"])
    a = jax.nn.sigmoid(row2 @ p["af_w1"][:, None] + p["af_b1"])
    b = jax.nn.sigmoid(col2 @ p["af_w2"][:, None] + p["af_b2"])
    alpha = a / (a + b)
    return alpha * row2 + (1.0 - alpha) * col2


if __name__ == "__main__":
    N, D = 8, 32   # small stand-in shapes: 8 table nodes, feature dim 32 (vs 300)
    key = jax.random.PRNGKey(0)
    k_feat, k_rg, k_cg, k_par = jax.random.split(key, 4)

    table_feat = jax.random.normal(k_feat, (N, D), jnp.float32)
    row_graph = jax.random.bernoulli(k_rg, 0.4, (N, N)).astype(jnp.float32)
    col_graph = jax.random.bernoulli(k_cg, 0.4, (N, N)).astype(jnp.float32)
    params = init_params(k_par, D)

    out = jax.jit(dualg_forward)(params, table_feat, row_graph, col_graph)
    out = jax.block_until_ready(out)

    assert out.shape == (N, D) and out.dtype == jnp.float32
    assert bool(jnp.all(jnp.isfinite(out)))
    ref = dualg_reference(params, table_feat, row_graph, col_graph)
    # loose tolerance: kernel uses bf16 MXU operands with f32 accumulation
    assert bool(jnp.allclose(out, ref, atol=0.1, rtol=0.1)), \
        float(jnp.max(jnp.abs(out - ref)))
    print("KERNEL_OK")
</pallas_src>

<mosaic_0001>
module attributes {stable_mosaic.version = 11 : i64} {
  func.func @dualg_kernel(%arg0: memref<8x8xbf16, #tpu.memory_space<vmem>>, %arg1: memref<8x8xbf16, #tpu.memory_space<vmem>>, %arg2: memref<8x128xbf16, #tpu.memory_space<vmem>>, %arg3: memref<128x1024xbf16, #tpu.memory_space<vmem>>, %arg4: memref<14x128xf32, #tpu.memory_space<vmem>>, %arg5: memref<128x128xbf16, #tpu.memory_space<vmem>>, %arg6: memref<8x128xf32, #tpu.memory_space<vmem>>) attributes {dimension_semantics = [], scalar_prefetch = 0 : i64, scratch_operands = 0 : i64, tpu.core_type = #tpu.core_type<tc>} {
    %0 = tpu.iota {dimensions = array<i32: 1>} : vector<1x128xi32>
    %c32_i32 = arith.constant 32 : i32
    %1 = vector.broadcast %c32_i32 : i32 to vector<1x128xi32>
    %2 = arith.cmpi slt, %0, %1 : vector<1x128xi32>
    %3 = arith.extui %2 : vector<1x128xi1> to vector<1x128xi32>
    %4 = arith.sitofp %3 : vector<1x128xi32> to vector<1x128xf32>
    %c0 = arith.constant 0 : index
    %c0_0 = arith.constant 0 : index
    %5 = vector.load %arg0[%c0, %c0_0] : memref<8x8xbf16, #tpu.memory_space<vmem>>, vector<8x8xbf16>
    %c0_1 = arith.constant 0 : index
    %c0_2 = arith.constant 0 : index
    %6 = vector.load %arg1[%c0_1, %c0_2] : memref<8x8xbf16, #tpu.memory_space<vmem>>, vector<8x8xbf16>
    %c0_3 = arith.constant 0 : index
    %c0_4 = arith.constant 0 : index
    %7 = vector.load %arg2[%c0_3, %c0_4] : memref<8x128xbf16, #tpu.memory_space<vmem>>, vector<8x128xbf16>
    %c0_5 = arith.constant 0 : index
    %c0_6 = arith.constant 0 : index
    %8 = vector.load %arg3[%c0_5, %c0_6] : memref<128x1024xbf16, #tpu.memory_space<vmem>>, vector<128x256xbf16>
    %cst = arith.constant dense<0.000000e+00> : vector<8x256xf32>
    %9 = tpu.matmul %7, %8, %cst {dimension_numbers = #tpu.dot_dimension_numbers<[1], [0], [0], [1], [0, 0, 1, 1], [], []>} : vector<8x128xbf16>, vector<128x256xbf16>, vector<8x256xf32> -> vector<8x256xf32>
    %10 = arith.truncf %9 : vector<8x256xf32> to vector<8x256xbf16>
    %11 = vector.extract_strided_slice %10 {offsets = [0, 0], sizes = [8, 128], strides = [1, 1]} : vector<8x256xbf16> to vector<8x128xbf16>
    %cst_7 = arith.constant dense<0.000000e+00> : vector<8x128xf32>
    %12 = tpu.matmul %5, %11, %cst_7 {dimension_numbers = #tpu.dot_dimension_numbers<[1], [0], [0], [1], [0, 0, 1, 1], [], []>} : vector<8x8xbf16>, vector<8x128xbf16>, vector<8x128xf32> -> vector<8x128xf32>
    %c0_8 = arith.constant 0 : index
    %c0_9 = arith.constant 0 : index
    %13 = vector.load %arg4[%c0_8, %c0_9] : memref<14x128xf32, #tpu.memory_space<vmem>>, vector<1x128xf32>
    %14 = vector.broadcast %13 : vector<1x128xf32> to vector<8x128xf32>
    %15 = arith.addf %12, %14 : vector<8x128xf32>
    %cst_10 = arith.constant 0.000000e+00 : f32
    %16 = vector.broadcast %cst_10 : f32 to vector<8x128xf32>
    %17 = arith.maximumf %15, %16 : vector<8x128xf32>
    %18 = vector.extract_strided_slice %10 {offsets = [0, 128], sizes = [8, 128], strides = [1, 1]} : vector<8x256xbf16> to vector<8x128xbf16>
    %cst_11 = arith.constant dense<0.000000e+00> : vector<8x128xf32>
    %19 = tpu.matmul %6, %18, %cst_11 {dimension_numbers = #tpu.dot_dimension_numbers<[1], [0], [0], [1], [0, 0, 1, 1], [], []>} : vector<8x8xbf16>, vector<8x128xbf16>, vector<8x128xf32> -> vector<8x128xf32>
    %c1 = arith.constant 1 : index
    %c0_12 = arith.constant 0 : index
    %20 = vector.load %arg4[%c1, %c0_12] : memref<14x128xf32, #tpu.memory_space<vmem>>, vector<1x128xf32>
    %21 = vector.broadcast %20 : vector<1x128xf32> to vector<8x128xf32>
    %22 = arith.addf %19, %21 : vector<8x128xf32>
    %cst_13 = arith.constant 0.000000e+00 : f32
    %23 = vector.broadcast %cst_13 : f32 to vector<8x128xf32>
    %24 = arith.maximumf %22, %23 : vector<8x128xf32>
    %25 = arith.truncf %17 : vector<8x128xf32> to vector<8x128xbf16>
    %c0_14 = arith.constant 0 : index
    %c256 = arith.constant 256 : index
    %26 = vector.load %arg3[%c0_14, %c256] : memref<128x1024xbf16, #tpu.memory_space<vmem>>, vector<128x128xbf16>
    %cst_15 = arith.constant dense<0.000000e+00> : vector<8x128xf32>
    %27 = tpu.matmul %25, %26, %cst_15 {dimension_numbers = #tpu.dot_dimension_numbers<[1], [0], [0], [1], [0, 0, 1, 1], [], []>} : vector<8x128xbf16>, vector<128x128xbf16>, vector<8x128xf32> -> vector<8x128xf32>
    %c2 = arith.constant 2 : index
    %c0_16 = arith.constant 0 : index
    %28 = vector.load %arg4[%c2, %c0_16] : memref<14x128xf32, #tpu.memory_space<vmem>>, vector<1x128xf32>
    %29 = vector.broadcast %28 : vector<1x128xf32> to vector<8x128xf32>
    %30 = arith.addf %27, %29 : vector<8x128xf32>
    %c3 = arith.constant 3 : index
    %c0_17 = arith.constant 0 : index
    %31 = vector.load %arg4[%c3, %c0_17] : memref<14x128xf32, #tpu.memory_space<vmem>>, vector<1x128xf32>
    %c4 = arith.constant 4 : index
    %c0_18 = arith.constant 0 : index
    %32 = vector.load %arg4[%c4, %c0_18] : memref<14x128xf32, #tpu.memory_space<vmem>>, vector<1x128xf32>
    %33 = vector.broadcast %4 : vector<1x128xf32> to vector<8x128xf32>
    %34 = arith.mulf %30, %33 : vector<8x128xf32>
    %cst_19 = arith.constant dense<0.000000e+00> : vector<8xf32>
    %35 = vector.multi_reduction <add>, %34, %cst_19 [1] : vector<8x128xf32> to vector<8xf32>
    %36 = vector.shape_cast %35 : vector<8xf32> to vector<8x1xf32>
    %cst_20 = arith.constant 3.125000e-02 : f32
    %37 = vector.broadcast %cst_20 : f32 to vector<8x1xf32>
    %38 = arith.mulf %36, %37 : vector<8x1xf32>
    %39 = vector.broadcast %38 : vector<8x1xf32> to vector<8x128xf32>
    %40 = arith.subf %30, %39 : vector<8x128xf32>
    %41 = vector.broadcast %4 : vector<1x128xf32> to vector<8x128xf32>
    %42 = arith.mulf %40, %41 : vector<8x128xf32>
    %43 = arith.mulf %42, %42 : vector<8x128xf32>
    %cst_21 = arith.constant dense<0.000000e+00> : vector<8xf32>
    %44 = vector.multi_reduction <add>, %43, %cst_21 [1] : vector<8x128xf32> to vector<8xf32>
    %45 = vector.shape_cast %44 : vector<8xf32> to vector<8x1xf32>
    %cst_22 = arith.constant 3.125000e-02 : f32
    %46 = vector.broadcast %cst_22 : f32 to vector<8x1xf32>
    %47 = arith.mulf %45, %46 : vector<8x1xf32>
    %cst_23 = arith.constant 9.99999974E-6 : f32
    %48 = vector.broadcast %cst_23 : f32 to vector<8x1xf32>
    %49 = arith.addf %47, %48 : vector<8x1xf32>
    %50 = math.rsqrt %49 : vector<8x1xf32>
    %51 = vector.broadcast %50 : vector<8x1xf32> to vector<8x128xf32>
    %52 = arith.mulf %42, %51 : vector<8x128xf32>
    %53 = vector.broadcast %31 : vector<1x128xf32> to vector<8x128xf32>
    %54 = arith.mulf %52, %53 : vector<8x128xf32>
    %55 = vector.broadcast %32 : vector<1x128xf32> to vector<8x128xf32>
    %56 = arith.addf %54, %55 : vector<8x128xf32>
    %57 = arith.truncf %24 : vector<8x128xf32> to vector<8x128xbf16>
    %c0_24 = arith.constant 0 : index
    %c384 = arith.constant 384 : index
    %58 = vector.load %arg3[%c0_24, %c384] : memref<128x1024xbf16, #tpu.memory_space<vmem>>, vector<128x128xbf16>
    %cst_25 = arith.constant dense<0.000000e+00> : vector<8x128xf32>
    %59 = tpu.matmul %57, %58, %cst_25 {dimension_numbers = #tpu.dot_dimension_numbers<[1], [0], [0], [1], [0, 0, 1, 1], [], []>} : vector<8x128xbf16>, vector<128x128xbf16>, vector<8x128xf32> -> vector<8x128xf32>
    %c5 = arith.constant 5 : index
    %c0_26 = arith.constant 0 : index
    %60 = vector.load %arg4[%c5, %c0_26] : memref<14x128xf32, #tpu.memory_space<vmem>>, vector<1x128xf32>
    %61 = vector.broadcast %60 : vector<1x128xf32> to vector<8x128xf32>
    %62 = arith.addf %59, %61 : vector<8x128xf32>
    %c6 = arith.constant 6 : index
    %c0_27 = arith.constant 0 : index
    %63 = vector.load %arg4[%c6, %c0_27] : memref<14x128xf32, #tpu.memory_space<vmem>>, vector<1x128xf32>
    %c7 = arith.constant 7 : index
    %c0_28 = arith.constant 0 : index
    %64 = vector.load %arg4[%c7, %c0_28] : memref<14x128xf32, #tpu.memory_space<vmem>>, vector<1x128xf32>
    %65 = vector.broadcast %4 : vector<1x128xf32> to vector<8x128xf32>
    %66 = arith.mulf %62, %65 : vector<8x128xf32>
    %cst_29 = arith.constant dense<0.000000e+00> : vector<8xf32>
    %67 = vector.multi_reduction <add>, %66, %cst_29 [1] : vector<8x128xf32> to vector<8xf32>
    %68 = vector.shape_cast %67 : vector<8xf32> to vector<8x1xf32>
    %cst_30 = arith.constant 3.125000e-02 : f32
    %69 = vector.broadcast %cst_30 : f32 to vector<8x1xf32>
    %70 = arith.mulf %68, %69 : vector<8x1xf32>
    %71 = vector.broadcast %70 : vector<8x1xf32> to vector<8x128xf32>
    %72 = arith.subf %62, %71 : vector<8x128xf32>
    %73 = vector.broadcast %4 : vector<1x128xf32> to vector<8x128xf32>
    %74 = arith.mulf %72, %73 : vector<8x128xf32>
    %75 = arith.mulf %74, %74 : vector<8x128xf32>
    %cst_31 = arith.constant dense<0.000000e+00> : vector<8xf32>
    %76 = vector.multi_reduction <add>, %75, %cst_31 [1] : vector<8x128xf32> to vector<8xf32>
    %77 = vector.shape_cast %76 : vector<8xf32> to vector<8x1xf32>
    %cst_32 = arith.constant 3.125000e-02 : f32
    %78 = vector.broadcast %cst_32 : f32 to vector<8x1xf32>
    %79 = arith.mulf %77, %78 : vector<8x1xf32>
    %cst_33 = arith.constant 9.99999974E-6 : f32
    %80 = vector.broadcast %cst_33 : f32 to vector<8x1xf32>
    %81 = arith.addf %79, %80 : vector<8x1xf32>
    %82 = math.rsqrt %81 : vector<8x1xf32>
    %83 = vector.broadcast %82 : vector<8x1xf32> to vector<8x128xf32>
    %84 = arith.mulf %74, %83 : vector<8x128xf32>
    %85 = vector.broadcast %63 : vector<1x128xf32> to vector<8x128xf32>
    %86 = arith.mulf %84, %85 : vector<8x128xf32>
    %87 = vector.broadcast %64 : vector<1x128xf32> to vector<8x128xf32>
    %88 = arith.addf %86, %87 : vector<8x128xf32>
    %89 = arith.truncf %56 : vector<8x128xf32> to vector<8x128xbf16>
    %c0_34 = arith.constant 0 : index
    %c512 = arith.constant 512 : index
    %90 = vector.load %arg3[%c0_34, %c512] : memref<128x1024xbf16, #tpu.memory_space<vmem>>, vector<128x128xbf16>
    %cst_35 = arith.constant dense<0.000000e+00> : vector<8x128xf32>
    %91 = tpu.matmul %89, %90, %cst_35 {dimension_numbers = #tpu.dot_dimension_numbers<[1], [0], [0], [1], [0, 0, 1, 1], [], []>} : vector<8x128xbf16>, vector<128x128xbf16>, vector<8x128xf32> -> vector<8x128xf32>
    %92 = arith.truncf %88 : vector<8x128xf32> to vector<8x128xbf16>
    %c0_36 = arith.constant 0 : index
    %c640 = arith.constant 640 : index
    %93 = vector.load %arg3[%c0_36, %c640] : memref<128x1024xbf16, #tpu.memory_space<vmem>>, vector<128x128xbf16>
    %cst_37 = arith.constant dense<0.000000e+00> : vector<8x128xf32>
    %94 = tpu.matmul %92, %93, %cst_37 {dimension_numbers = #tpu.dot_dimension_numbers<[1], [0], [0], [1], [0, 0, 1, 1], [], []>} : vector<8x128xbf16>, vector<128x128xbf16>, vector<8x128xf32> -> vector<8x128xf32>
    %95 = arith.addf %91, %94 : vector<8x128xf32>
    %c8 = arith.constant 8 : index
    %c0_38 = arith.constant 0 : index
    %96 = vector.load %arg4[%c8, %c0_38] : memref<14x128xf32, #tpu.memory_space<vmem>>, vector<1x128xf32>
    %97 = vector.broadcast %96 : vector<1x128xf32> to vector<8x128xf32>
    %98 = arith.addf %95, %97 : vector<8x128xf32>
    %c9 = arith.constant 9 : index
    %c0_39 = arith.constant 0 : index
    %99 = vector.load %arg4[%c9, %c0_39] : memref<14x128xf32, #tpu.memory_space<vmem>>, vector<1x128xf32>
    %c10 = arith.constant 10 : index
    %c0_40 = arith.constant 0 : index
    %100 = vector.load %arg4[%c10, %c0_40] : memref<14x128xf32, #tpu.memory_space<vmem>>, vector<1x128xf32>
    %101 = vector.broadcast %4 : vector<1x128xf32> to vector<8x128xf32>
    %102 = arith.mulf %98, %101 : vector<8x128xf32>
    %cst_41 = arith.constant dense<0.000000e+00> : vector<8xf32>
    %103 = vector.multi_reduction <add>, %102, %cst_41 [1] : vector<8x128xf32> to vector<8xf32>
    %104 = vector.shape_cast %103 : vector<8xf32> to vector<8x1xf32>
    %cst_42 = arith.constant 3.125000e-02 : f32
    %105 = vector.broadcast %cst_42 : f32 to vector<8x1xf32>
    %106 = arith.mulf %104, %105 : vector<8x1xf32>
    %107 = vector.broadcast %106 : vector<8x1xf32> to vector<8x128xf32>
    %108 = arith.subf %98, %107 : vector<8x128xf32>
    %109 = vector.broadcast %4 : vector<1x128xf32> to vector<8x128xf32>
    %110 = arith.mulf %108, %109 : vector<8x128xf32>
    %111 = arith.mulf %110, %110 : vector<8x128xf32>
    %cst_43 = arith.constant dense<0.000000e+00> : vector<8xf32>
    %112 = vector.multi_reduction <add>, %111, %cst_43 [1] : vector<8x128xf32> to vector<8xf32>
    %113 = vector.shape_cast %112 : vector<8xf32> to vector<8x1xf32>
    %cst_44 = arith.constant 3.125000e-02 : f32
    %114 = vector.broadcast %cst_44 : f32 to vector<8x1xf32>
    %115 = arith.mulf %113, %114 : vector<8x1xf32>
    %cst_45 = arith.constant 9.99999974E-6 : f32
    %116 = vector.broadcast %cst_45 : f32 to vector<8x1xf32>
    %117 = arith.addf %115, %116 : vector<8x1xf32>
    %118 = math.rsqrt %117 : vector<8x1xf32>
    %119 = vector.broadcast %118 : vector<8x1xf32> to vector<8x128xf32>
    %120 = arith.mulf %110, %119 : vector<8x128xf32>
    %121 = vector.broadcast %99 : vector<1x128xf32> to vector<8x128xf32>
    %122 = arith.mulf %120, %121 : vector<8x128xf32>
    %123 = vector.broadcast %100 : vector<1x128xf32> to vector<8x128xf32>
    %124 = arith.addf %122, %123 : vector<8x128xf32>
    %125 = arith.truncf %124 : vector<8x128xf32> to vector<8x128xbf16>
    %c0_46 = arith.constant 0 : index
    %c768 = arith.constant 768 : index
    %126 = vector.load %arg3[%c0_46, %c768] : memref<128x1024xbf16, #tpu.memory_space<vmem>>, vector<128x256xbf16>
    %cst_47 = arith.constant dense<0.000000e+00> : vector<8x256xf32>
    %127 = tpu.matmul %125, %126, %cst_47 {dimension_numbers = #tpu.dot_dimension_numbers<[1], [0], [0], [1], [0, 0, 1, 1], [], []>} : vector<8x128xbf16>, vector<128x256xbf16>, vector<8x256xf32> -> vector<8x256xf32>
    %128 = arith.truncf %127 : vector<8x256xf32> to vector<8x256xbf16>
    %129 = vector.extract_strided_slice %128 {offsets = [0, 0], sizes = [8, 128], strides = [1, 1]} : vector<8x256xbf16> to vector<8x128xbf16>
    %cst_48 = arith.constant dense<0.000000e+00> : vector<8x128xf32>
    %130 = tpu.matmul %5, %129, %cst_48 {dimension_numbers = #tpu.dot_dimension_numbers<[1], [0], [0], [1], [0, 0, 1, 1], [], []>} : vector<8x8xbf16>, vector<8x128xbf16>, vector<8x128xf32> -> vector<8x128xf32>
    %c11 = arith.constant 11 : index
    %c0_49 = arith.constant 0 : index
    %131 = vector.load %arg4[%c11, %c0_49] : memref<14x128xf32, #tpu.memory_space<vmem>>, vector<1x128xf32>
    %132 = vector.broadcast %131 : vector<1x128xf32> to vector<8x128xf32>
    %133 = arith.addf %130, %132 : vector<8x128xf32>
    %cst_50 = arith.constant 0.000000e+00 : f32
    %134 = vector.broadcast %cst_50 : f32 to vector<8x128xf32>
    %135 = arith.maximumf %133, %134 : vector<8x128xf32>
    %136 = vector.extract_strided_slice %128 {offsets = [0, 128], sizes = [8, 128], strides = [1, 1]} : vector<8x256xbf16> to vector<8x128xbf16>
    %cst_51 = arith.constant dense<0.000000e+00> : vector<8x128xf32>
    %137 = tpu.matmul %6, %136, %cst_51 {dimension_numbers = #tpu.dot_dimension_numbers<[1], [0], [0], [1], [0, 0, 1, 1], [], []>} : vector<8x8xbf16>, vector<8x128xbf16>, vector<8x128xf32> -> vector<8x128xf32>
    %c12 = arith.constant 12 : index
    %c0_52 = arith.constant 0 : index
    %138 = vector.load %arg4[%c12, %c0_52] : memref<14x128xf32, #tpu.memory_space<vmem>>, vector<1x128xf32>
    %139 = vector.broadcast %138 : vector<1x128xf32> to vector<8x128xf32>
    %140 = arith.addf %137, %139 : vector<8x128xf32>
    %cst_53 = arith.constant 0.000000e+00 : f32
    %141 = vector.broadcast %cst_53 : f32 to vector<8x128xf32>
    %142 = arith.maximumf %140, %141 : vector<8x128xf32>
    %143 = arith.truncf %135 : vector<8x128xf32> to vector<8x128xbf16>
    %c0_54 = arith.constant 0 : index
    %c0_55 = arith.constant 0 : index
    %144 = vector.load %arg5[%c0_54, %c0_55] : memref<128x128xbf16, #tpu.memory_space<vmem>>, vector<128x128xbf16>
    %cst_56 = arith.constant dense<0.000000e+00> : vector<8x128xf32>
    %145 = tpu.matmul %143, %144, %cst_56 {dimension_numbers = #tpu.dot_dimension_numbers<[1], [0], [0], [1], [0, 0, 1, 1], [], []>} : vector<8x128xbf16>, vector<128x128xbf16>, vector<8x128xf32> -> vector<8x128xf32>
    %146 = arith.truncf %142 : vector<8x128xf32> to vector<8x128xbf16>
    %c0_57 = arith.constant 0 : index
    %c0_58 = arith.constant 0 : index
    %147 = vector.load %arg5[%c0_57, %c0_58] : memref<128x128xbf16, #tpu.memory_space<vmem>>, vector<128x128xbf16>
    %cst_59 = arith.constant dense<0.000000e+00> : vector<8x128xf32>
    %148 = tpu.matmul %146, %147, %cst_59 {dimension_numbers = #tpu.dot_dimension_numbers<[1], [0], [0], [1], [0, 0, 1, 1], [], []>} : vector<8x128xbf16>, vector<128x128xbf16>, vector<8x128xf32> -> vector<8x128xf32>
    %149 = vector.extract_strided_slice %145 {offsets = [0, 0], sizes = [8, 1], strides = [1, 1]} : vector<8x128xf32> to vector<8x1xf32>
    %c13 = arith.constant 13 : index
    %c0_60 = arith.constant 0 : index
    %150 = vector.load %arg4[%c13, %c0_60] : memref<14x128xf32, #tpu.memory_space<vmem>>, vector<1x1xf32>
    %151 = vector.broadcast %150 : vector<1x1xf32> to vector<8x1xf32>
    %152 = arith.addf %149, %151 : vector<8x1xf32>
    %153 = arith.negf %152 : vector<8x1xf32>
    %154 = math.exp %153 : vector<8x1xf32>
    %cst_61 = arith.constant 1.000000e+00 : f32
    %155 = vector.broadcast %cst_61 : f32 to vector<8x1xf32>
    %156 = arith.addf %155, %154 : vector<8x1xf32>
    %157 = arith.divf %155, %156 : vector<8x1xf32>
    %158 = vector.extract_strided_slice %148 {offsets = [0, 1], sizes = [8, 1], strides = [1, 1]} : vector<8x128xf32> to vector<8x1xf32>
    %c13_62 = arith.constant 13 : index
    %c1_63 = arith.constant 1 : index
    %159 = vector.load %arg4[%c13_62, %c1_63] : memref<14x128xf32, #tpu.memory_space<vmem>>, vector<1x1xf32>
    %160 = vector.broadcast %159 : vector<1x1xf32> to vector<8x1xf32>
    %161 = arith.addf %158, %160 : vector<8x1xf32>
    %162 = arith.negf %161 : vector<8x1xf32>
    %163 = math.exp %162 : vector<8x1xf32>
    %cst_64 = arith.constant 1.000000e+00 : f32
    %164 = vector.broadcast %cst_64 : f32 to vector<8x1xf32>
    %165 = arith.addf %164, %163 : vector<8x1xf32>
    %166 = arith.divf %164, %165 : vector<8x1xf32>
    %167 = arith.addf %157, %166 : vector<8x1xf32>
    %168 = arith.divf %157, %167 : vector<8x1xf32>
    %169 = vector.broadcast %168 : vector<8x1xf32> to vector<8x128xf32>
    %170 = arith.mulf %169, %135 : vector<8x128xf32>
    %cst_65 = arith.constant 1.000000e+00 : f32
    %171 = vector.broadcast %cst_65 : f32 to vector<8x1xf32>
    %172 = arith.subf %171, %168 : vector<8x1xf32>
    %173 = vector.broadcast %172 : vector<8x1xf32> to vector<8x128xf32>
    %174 = arith.mulf %173, %142 : vector<8x128xf32>
    %175 = arith.addf %170, %174 : vector<8x128xf32>
    %c0_66 = arith.constant 0 : index
    %c0_67 = arith.constant 0 : index
    %176 = vector.load %arg6[%c0_66, %c0_67] : memref<8x128xf32, #tpu.memory_space<vmem>>, vector<8x128xf32>
    tpu.vector_store %arg6[%c0_66, %c0_67], %175 {strides = array<i32>} : memref<8x128xf32, #tpu.memory_space<vmem>>, vector<8x128xf32>,
    return
  }
}

</mosaic_0001>

<llo_original>
// kernel: dualg_forward.1
$region0: #{dualg_forward.1}
  #allocation0 [shape = 'u32[]', space=smem, size = 0x4, offset = 0x4, fixed_abs, tag = 'smem constant byte address 0x4 - core index']
  #allocation1 [shape = 'u32[72,128]{1,0:T(1,128)}', space=vmem, size = 0x9000, scoped, tag = 'internal scratch']
  %s0 = inlined_call_operand.vmem [shape: bf16[8,8], index: 0, kind: input, shape index: {}]
  %s1 = inlined_call_operand.vmem [shape: bf16[8,8], index: 1, kind: input, shape index: {}]
  %s2 = inlined_call_operand.vmem [shape: bf16[8,128], index: 2, kind: input, shape index: {}]
  %s3 = inlined_call_operand.vmem [shape: bf16[128,1024], index: 3, kind: input, shape index: {}]
  %s4 = inlined_call_operand.vmem [shape: f32[14,128], index: 4, kind: input, shape index: {}]
  %s5 = inlined_call_operand.vmem [shape: bf16[128,128], index: 5, kind: input, shape index: {}]
  %s6 = inlined_call_operand.hbm [shape: f32[8,128], index: 6, kind: output, shape index: {}]
  %s7 = sld [smem:[#allocation0]]
  $region34: #{dualg_forward.1} parent=0
    _
  %s9 = ssub.s32 1, %s7
  %s10 = scalar_select 0, %s9, %s7
  $region1: #{dualg_forward.1} parent=0
    #allocation2 [shape = 'u8[4096]{0}', space=vmem, size = 0x1000, scoped, tag = 'output window, operand 0, single buffered']
    #allocation3 [shape = 's32[1]{0}', space=sflag, size = 0x4, scoped, tag = 'scoped memory for dualg_forward.1']
    %11 = vsyncpa [#allocation3], 0
    // Predicated region
    $region2: #{dualg_forward.1} parent=1 // pred_check
      _
    $region3: #{dualg_forward.1} parent=1 // pred_check_branch
      %13 = sbr.rel (0) target = $region5
    $region4: #{dualg_forward.1} parent=1 // pred_region
      _
    $region5: #{dualg_forward.1} parent=1 // pred_fallthru
      _
    // Predicated region
    $region6: #{dualg_forward.1} parent=1 // pred_check
      _
    $region7: #{dualg_forward.1} parent=1 // pred_check_branch
      %15 = sbr.rel (0) target = $region9
    $region8: #{dualg_forward.1} parent=1 // pred_region
      _
    $region9: #{dualg_forward.1} parent=1 // pred_fallthru
      _
    // Predicated region
    $region10: #{dualg_forward.1} parent=1 // pred_check
      _
    $region11: #{dualg_forward.1} parent=1 // pred_check_branch
      %17 = sbr.rel (0) target = $region13
    $region12: #{dualg_forward.1} parent=1 // pred_region
      _
    $region13: #{dualg_forward.1} parent=1 // pred_fallthru
      _
    // Predicated region
    $region14: #{dualg_forward.1} parent=1 // pred_check
      _
    $region15: #{dualg_forward.1} parent=1 // pred_check_branch
      %19 = sbr.rel (0) target = $region17
    $region16: #{dualg_forward.1} parent=1 // pred_region
      _
    $region17: #{dualg_forward.1} parent=1 // pred_fallthru
      _
    // Predicated region
    $region18: #{dualg_forward.1} parent=1 // pred_check
      _
    $region19: #{dualg_forward.1} parent=1 // pred_check_branch
      %21 = sbr.rel (0) target = $region21
    $region20: #{dualg_forward.1} parent=1 // pred_region
      _
    $region21: #{dualg_forward.1} parent=1 // pred_fallthru
      _
    // Predicated region
    $region22: #{dualg_forward.1} parent=1 // pred_check
      _
    $region23: #{dualg_forward.1} parent=1 // pred_check_branch
      %23 = sbr.rel (0) target = $region25
    $region24: #{dualg_forward.1} parent=1 // pred_region
      _
    $region25: #{dualg_forward.1} parent=1 // pred_fallthru
      _
    %v25 = vlaneseq
    %v26 = vand.u32 %v25, 127
    %vm27 = vcmp.lt.s32.totalorder %v26, 32
    %v28 = vsel %vm27, 1, 0
    %v29 = vcvt.s32.f32 %v28
    %v30 = vld [vmem:[%s0] sm:$0xf]
    %v31 = vld [vmem:[%s1] sm:$0xf]
    %v32 = vld [vmem:[%s2] sm:$0xf]
    %v33 = vld [vmem:[%s3] sm:$0xff]
    %v34 = vld [vmem:[%s3 + $0x20] sm:$0xff]
    %v35 = vld [vmem:[%s3 + $0x40] sm:$0xff]
    %v36 = vld [vmem:[%s3 + $0x60] sm:$0xff]
    %v37 = vld [vmem:[%s3 + $0x80] sm:$0xff]
    %v38 = vld [vmem:[%s3 + $0xa0] sm:$0xff]
    %v39 = vld [vmem:[%s3 + $0xc0] sm:$0xff]
    %v40 = vld [vmem:[%s3 + $0xe0] sm:$0xff]
    %v41 = vld [vmem:[%s3 + $0x100] sm:$0xff]
    %v42 = vld [vmem:[%s3 + $0x120] sm:$0xff]
    %v43 = vld [vmem:[%s3 + $0x140] sm:$0xff]
    %v44 = vld [vmem:[%s3 + $0x160] sm:$0xff]
    %v45 = vld [vmem:[%s3 + $0x180] sm:$0xff]
    %v46 = vld [vmem:[%s3 + $0x1a0] sm:$0xff]
    %v47 = vld [vmem:[%s3 + $0x1c0] sm:$0xff]
    %v48 = vld [vmem:[%s3 + $0x1e0] sm:$0xff]
    %v65 = vunpack.c.l.b16 %v33
    %v66 = vunpack.c.h.b16 %v33
    %v67 = vunpack.c.l.b16 %v34
    %v68 = vunpack.c.h.b16 %v34
    %v69 = vunpack.c.l.b16 %v35
    %v70 = vunpack.c.h.b16 %v35
    %v71 = vunpack.c.l.b16 %v36
    %v72 = vunpack.c.h.b16 %v36
    %v73 = vunpack.c.l.b16 %v37
    %v74 = vunpack.c.h.b16 %v37
    %v75 = vunpack.c.l.b16 %v38
    %v76 = vunpack.c.h.b16 %v38
    %v77 = vunpack.c.l.b16 %v39
    %v78 = vunpack.c.h.b16 %v39
    %v79 = vunpack.c.l.b16 %v40
    %v80 = vunpack.c.h.b16 %v40
    %v81 = vunpack.c.l.b16 %v41
    %v82 = vunpack.c.h.b16 %v41
    %v83 = vunpack.c.l.b16 %v42
    %v84 = vunpack.c.h.b16 %v42
    %v85 = vunpack.c.l.b16 %v43
    %v86 = vunpack.c.h.b16 %v43
    %v87 = vunpack.c.l.b16 %v44
    %v88 = vunpack.c.h.b16 %v44
    %v89 = vunpack.c.l.b16 %v45
    %v90 = vunpack.c.h.b16 %v45
    %v91 = vunpack.c.l.b16 %v46
    %v92 = vunpack.c.h.b16 %v46
    %v93 = vunpack.c.l.b16 %v47
    %v94 = vunpack.c.h.b16 %v47
    %v95 = vunpack.c.l.b16 %v48
    %v96 = vunpack.c.h.b16 %v48
    %v97 = vpack.c.b16 %v67, %v65
    %v98 = vpack.c.b16 %v68, %v66
    %v99 = vpack.c.b16 %v71, %v69
    %v100 = vpack.c.b16 %v72, %v70
    %v101 = vpack.c.b16 %v75, %v73
    %v102 = vpack.c.b16 %v76, %v74
    %v103 = vpack.c.b16 %v79, %v77
    %v104 = vpack.c.b16 %v80, %v78
    %v105 = vpack.c.b16 %v83, %v81
    %v106 = vpack.c.b16 %v84, %v82
    %v107 = vpack.c.b16 %v87, %v85
    %v108 = vpack.c.b16 %v88, %v86
    %v109 = vpack.c.b16 %v91, %v89
    %v110 = vpack.c.b16 %v92, %v90
    %v111 = vpack.c.b16 %v95, %v93
    %v112 = vpack.c.b16 %v96, %v94
    %129 = vmatpush.bf16.msra.mxu0 %v111
    %130 = vmatpush.bf16.msra.mxu0 %v109
    %131 = vmatpush.bf16.msra.mxu0 %v107
    %132 = vmatpush.bf16.msra.mxu0 %v105
    %133 = vmatpush.bf16.msra.mxu0 %v103
    %134 = vmatpush.bf16.msra.mxu0 %v101
    %135 = vmatpush.bf16.msra.mxu0 %v99
    %136 = vmatpush.bf16.msra.mxu0 %v97
    %137 = vmatmul.bf16.gmra.mxu0 %v32
    %v138 = vpop.f32.mrf.mxu0
    %v139 = vadd.f32 0.0, %v138
    %v140 = vpop.f32.mrf.mxu0
    %141 = vdwg.mxu0
    %142 = vmatpush.bf16.msra.mxu0 %v112
    %143 = vmatpush.bf16.msra.mxu0 %v110
    %144 = vmatpush.bf16.msra.mxu0 %v108
    %145 = vmatpush.bf16.msra.mxu0 %v106
    %146 = vmatpush.bf16.msra.mxu0 %v104
    %147 = vmatpush.bf16.msra.mxu0 %v102
    %148 = vmatpush.bf16.msra.mxu0 %v100
    %149 = vmatpush.bf16.msra.mxu0 %v98
    %150 = vmatmul.bf16.gmra.mxu0 %v32
    %v151 = vpop.f32.mrf.mxu0
    %v152 = vadd.f32 0.0, %v151
    %v153 = vpop.f32.mrf.mxu0
    %154 = vdwg.mxu0
    %v155 = vpack.c.bf16 %v152, %v139
    %v156 = vld [vmem:[%s4] sm:$0x1]
    %v157 = vperm.slane %v156, 0
    %vm158 = vcmask 64512
    %v160 = vsel %vm158, %v30, 0
    %vm162 = vcmask 1043456
    %v164 = vsel %vm162, %v155, 0
    %166 = vmatpush.bf16.msra.mxu0 0
    %167 = vmatpush.bf16.msra.mxu0 0
    %168 = vmatpush.bf16.msra.mxu0 0
    %169 = vmatpush.bf16.msra.mxu0 0
    %170 = vmatpush.bf16.msra.mxu0 0
    %171 = vmatpush.bf16.msra.mxu0 0
    %172 = vmatpush.bf16.msra.mxu0 0
    %173 = vmatpush.bf16.msra.mxu0 %v164
    %174 = vmatmul.bf16.gmra.mxu0 %v160
    %v175 = vpop.f32.mrf.mxu0
    %v176 = vadd.f32 %v157, %v175
    %v177 = vpop.f32.mrf.mxu0
    %178 = vdwg.mxu0
    %v179 = vmax.f32 %v176, 0.0
    %v180 = vld [vmem:[%s4 + $0x1] sm:$0x1]
    %v181 = vperm.slane %v180, 0
    %v183 = vunpack.c.h.b16 %v155
    %v184 = vpack.c.b16 %v183, %v183
    %v186 = vsel %vm158, %v31, 0
    %v189 = vsel %vm162, %v184, 0
    %191 = vmatpush.bf16.msra.mxu0 0
    %192 = vmatpush.bf16.msra.mxu0 0
    %193 = vmatpush.bf16.msra.mxu0 0
    %194 = vmatpush.bf16.msra.mxu0 0
    %195 = vmatpush.bf16.msra.mxu0 0
    %196 = vmatpush.bf16.msra.mxu0 0
    %197 = vmatpush.bf16.msra.mxu0 0
    %198 = vmatpush.bf16.msra.mxu0 %v189
    %199 = vmatmul.bf16.gmra.mxu0 %v186
    %v200 = vpop.f32.mrf.mxu0
    %v201 = vadd.f32 %v181, %v200
    %v202 = vpop.f32.mrf.mxu0
    %203 = vdwg.mxu0
    %v204 = vmax.f32 %v201, 0.0
    %v205 = vpack.c.bf16 %v179, %v179
    %v206 = vld [vmem:[%s3 + $0x8] sm:$0xf]
    %v207 = vld [vmem:[%s3 + $0x28] sm:$0xf]
    %v208 = vld [vmem:[%s3 + $0x48] sm:$0xf]
    %v209 = vld [vmem:[%s3 + $0x68] sm:$0xf]
    %v210 = vld [vmem:[%s3 + $0x88] sm:$0xf]
    %v211 = vld [vmem:[%s3 + $0xa8] sm:$0xf]
    %v212 = vld [vmem:[%s3 + $0xc8] sm:$0xf]
    %v213 = vld [vmem:[%s3 + $0xe8] sm:$0xf]
    %v214 = vld [vmem:[%s3 + $0x108] sm:$0xf]
    %v215 = vld [vmem:[%s3 + $0x128] sm:$0xf]
    %v216 = vld [vmem:[%s3 + $0x148] sm:$0xf]
    %v217 = vld [vmem:[%s3 + $0x168] sm:$0xf]
    %v218 = vld [vmem:[%s3 + $0x188] sm:$0xf]
    %v219 = vld [vmem:[%s3 + $0x1a8] sm:$0xf]
    %v220 = vld [vmem:[%s3 + $0x1c8] sm:$0xf]
    %v221 = vld [vmem:[%s3 + $0x1e8] sm:$0xf]
    %v222 = vld [vmem:[%s4 + $0x2] sm:$0x1]
    %v223 = vperm.slane %v222, 0
    %v240 = vunpack.c.l.b16 %v206
    %v241 = vunpack.c.l.b16 %v207
    %v242 = vunpack.c.l.b16 %v208
    %v243 = vunpack.c.l.b16 %v209
    %v244 = vunpack.c.l.b16 %v210
    %v245 = vunpack.c.l.b16 %v211
    %v246 = vunpack.c.l.b16 %v212
    %v247 = vunpack.c.l.b16 %v213
    %v248 = vunpack.c.l.b16 %v214
    %v249 = vunpack.c.l.b16 %v215
    %v250 = vunpack.c.l.b16 %v216
    %v251 = vunpack.c.l.b16 %v217
    %v252 = vunpack.c.l.b16 %v218
    %v253 = vunpack.c.l.b16 %v219
    %v254 = vunpack.c.l.b16 %v220
    %v255 = vunpack.c.l.b16 %v221
    %v256 = vpack.c.b16 %v241, %v240
    %v257 = vpack.c.b16 %v243, %v242
    %v258 = vpack.c.b16 %v245, %v244
    %v259 = vpack.c.b16 %v247, %v246
    %v260 = vpack.c.b16 %v249, %v248
    %v261 = vpack.c.b16 %v251, %v250
    %v262 = vpack.c.b16 %v253, %v252
    %v263 = vpack.c.b16 %v255, %v254
    %272 = vmatpush.bf16.msra.mxu0 %v263
    %273 = vmatpush.bf16.msra.mxu0 %v262
    %274 = vmatpush.bf16.msra.mxu0 %v261
    %275 = vmatpush.bf16.msra.mxu0 %v260
    %276 = vmatpush.bf16.msra.mxu0 %v259
    %277 = vmatpush.bf16.msra.mxu0 %v258
    %278 = vmatpush.bf16.msra.mxu0 %v257
    %279 = vmatpush.bf16.msra.mxu0 %v256
    %280 = vmatmul.bf16.gmra.mxu0 %v205
    %v281 = vpop.f32.mrf.mxu0
    %v282 = vadd.f32 %v223, %v281
    %v283 = vpop.f32.mrf.mxu0
    %284 = vdwg.mxu0
    %v285 = vld [vmem:[%s4 + $0x3] sm:$0x1]
    %v286 = vld [vmem:[%s4 + $0x4] sm:$0x1]
    %v287 = vmul.f32 %v282, %v29
    %288 = vadd.xlane.f32.xlu0 %v287
    %v289 = vpop.xlane.xlu0 %288
    %v290 = vmul.f32 %v289, 0.03125
    %v291 = vsub.f32 %v282, %v290
    %v292 = vmul.f32 %v291, %v29
    %v293 = vmul.f32 %v292, %v292
    %294 = vadd.xlane.f32.xlu0 %v293
    %v295 = vpop.xlane.xlu0 %294
    %v296 = vmul.f32 %v295, 0.03125
    %v297 = vadd.f32 %v296, 1e-05
    %v298 = vrsqrt.pop %v297
    %v299 = vmul.f32 %v298, %v297
    %v300 = vmul.f32 %v299, %v298
    %v301 = vmul.f32 0.5, %v300
    %v302 = vsub.f32 1.5, %v301
    %v303 = vmul.f32 %v298, %v302
    %vm304 = vweird.f32 %v297
    %vm305 = vweird.f32 %v298
    %vm306 = vmor %vm304, %vm305
    %v307 = vsel %vm306, %v298, %v303
    %v308 = vmul.f32 %v292, %v307
    %v309 = vperm.slane %v285, 0
    %v310 = vmul.f32 %v308, %v309
    %v311 = vperm.slane %v286, 0
    %v312 = vadd.f32 %v310, %v311
    %v313 = vpack.c.bf16 %v204, %v204
    %v314 = vld [vmem:[%s3 + $0xc] sm:$0xf]
    %v315 = vld [vmem:[%s3 + $0x2c] sm:$0xf]
    %v316 = vld [vmem:[%s3 + $0x4c] sm:$0xf]
    %v317 = vld [vmem:[%s3 + $0x6c] sm:$0xf]
    %v318 = vld [vmem:[%s3 + $0x8c] sm:$0xf]
    %v319 = vld [vmem:[%s3 + $0xac] sm:$0xf]
    %v320 = vld [vmem:[%s3 + $0xcc] sm:$0xf]
    %v321 = vld [vmem:[%s3 + $0xec] sm:$0xf]
    %v322 = vld [vmem:[%s3 + $0x10c] sm:$0xf]
    %v323 = vld [vmem:[%s3 + $0x12c] sm:$0xf]
    %v324 = vld [vmem:[%s3 + $0x14c] sm:$0xf]
    %v325 = vld [vmem:[%s3 + $0x16c] sm:$0xf]
    %v326 = vld [vmem:[%s3 + $0x18c] sm:$0xf]
    %v327 = vld [vmem:[%s3 + $0x1ac] sm:$0xf]
    %v328 = vld [vmem:[%s3 + $0x1cc] sm:$0xf]
    %v329 = vld [vmem:[%s3 + $0x1ec] sm:$0xf]
    %v330 = vld [vmem:[%s4 + $0x5] sm:$0x1]
    %v331 = vperm.slane %v330, 0
    %v348 = vunpack.c.l.b16 %v314
    %v349 = vunpack.c.l.b16 %v315
    %v350 = vunpack.c.l.b16 %v316
    %v351 = vunpack.c.l.b16 %v317
    %v352 = vunpack.c.l.b16 %v318
    %v353 = vunpack.c.l.b16 %v319
    %v354 = vunpack.c.l.b16 %v320
    %v355 = vunpack.c.l.b16 %v321
    %v356 = vunpack.c.l.b16 %v322
    %v357 = vunpack.c.l.b16 %v323
    %v358 = vunpack.c.l.b16 %v324
    %v359 = vunpack.c.l.b16 %v325
    %v360 = vunpack.c.l.b16 %v326
    %v361 = vunpack.c.l.b16 %v327
    %v362 = vunpack.c.l.b16 %v328
    %v363 = vunpack.c.l.b16 %v329
    %v364 = vpack.c.b16 %v349, %v348
    %v365 = vpack.c.b16 %v351, %v350
    %v366 = vpack.c.b16 %v353, %v352
    %v367 = vpack.c.b16 %v355, %v354
    %v368 = vpack.c.b16 %v357, %v356
    %v369 = vpack.c.b16 %v359, %v358
    %v370 = vpack.c.b16 %v361, %v360
    %v371 = vpack.c.b16 %v363, %v362
    %380 = vmatpush.bf16.msra.mxu0 %v371
    %381 = vmatpush.bf16.msra.mxu0 %v370
    %382 = vmatpush.bf16.msra.mxu0 %v369
    %383 = vmatpush.bf16.msra.mxu0 %v368
    %384 = vmatpush.bf16.msra.mxu0 %v367
    %385 = vmatpush.bf16.msra.mxu0 %v366
    %386 = vmatpush.bf16.msra.mxu0 %v365
    %387 = vmatpush.bf16.msra.mxu0 %v364
    %388 = vmatmul.bf16.gmra.mxu0 %v313
    %v389 = vpop.f32.mrf.mxu0
    %v390 = vadd.f32 %v331, %v389
    %v391 = vpop.f32.mrf.mxu0
    %392 = vdwg.mxu0
    %v393 = vld [vmem:[%s4 + $0x6] sm:$0x1]
    %v394 = vld [vmem:[%s4 + $0x7] sm:$0x1]
    %v395 = vmul.f32 %v390, %v29
    %396 = vadd.xlane.f32.xlu0 %v395
    %v397 = vpop.xlane.xlu0 %396
    %v398 = vmul.f32 %v397, 0.03125
    %v399 = vsub.f32 %v390, %v398
    %v400 = vmul.f32 %v399, %v29
    %v401 = vmul.f32 %v400, %v400
    %402 = vadd.xlane.f32.xlu0 %v401
    %v403 = vpop.xlane.xlu0 %402
    %v404 = vmul.f32 %v403, 0.03125
    %v405 = vadd.f32 %v404, 1e-05
    %v406 = vrsqrt.pop %v405
    %v407 = vmul.f32 %v406, %v405
    %v408 = vmul.f32 %v407, %v406
    %v409 = vmul.f32 0.5, %v408
    %v410 = vsub.f32 1.5, %v409
    %v411 = vmul.f32 %v406, %v410
    %vm412 = vweird.f32 %v405
    %vm413 = vweird.f32 %v406
    %vm414 = vmor %vm412, %vm413
    %v415 = vsel %vm414, %v406, %v411
    %v416 = vmul.f32 %v400, %v415
    %v417 = vperm.slane %v393, 0
    %v418 = vmul.f32 %v416, %v417
    %v419 = vperm.slane %v394, 0
    %v420 = vadd.f32 %v418, %v419
    %v421 = vpack.c.bf16 %v312, %v312
    %v422 = vld [vmem:[%s3 + $0x10] sm:$0xf]
    %v423 = vld [vmem:[%s3 + $0x30] sm:$0xf]
    %v424 = vld [vmem:[%s3 + $0x50] sm:$0xf]
    %v425 = vld [vmem:[%s3 + $0x70] sm:$0xf]
    %v426 = vld [vmem:[%s3 + $0x90] sm:$0xf]
    %v427 = vld [vmem:[%s3 + $0xb0] sm:$0xf]
    %v428 = vld [vmem:[%s3 + $0xd0] sm:$0xf]
    %v429 = vld [vmem:[%s3 + $0xf0] sm:$0xf]
    %v430 = vld [vmem:[%s3 + $0x110] sm:$0xf]
    %v431 = vld [vmem:[%s3 + $0x130] sm:$0xf]
    %v432 = vld [vmem:[%s3 + $0x150] sm:$0xf]
    %v433 = vld [vmem:[%s3 + $0x170] sm:$0xf]
    %v434 = vld [vmem:[%s3 + $0x190] sm:$0xf]
    %v435 = vld [vmem:[%s3 + $0x1b0] sm:$0xf]
    %v436 = vld [vmem:[%s3 + $0x1d0] sm:$0xf]
    %v437 = vld [vmem:[%s3 + $0x1f0] sm:$0xf]
    %v438 = vpack.c.bf16 %v420, %v420
    %v439 = vld [vmem:[%s3 + $0x14] sm:$0xf]
    %v440 = vld [vmem:[%s3 + $0x34] sm:$0xf]
    %v441 = vld [vmem:[%s3 + $0x54] sm:$0xf]
    %v442 = vld [vmem:[%s3 + $0x74] sm:$0xf]
    %v443 = vld [vmem:[%s3 + $0x94] sm:$0xf]
    %v444 = vld [vmem:[%s3 + $0xb4] sm:$0xf]
    %v445 = vld [vmem:[%s3 + $0xd4] sm:$0xf]
    %v446 = vld [vmem:[%s3 + $0xf4] sm:$0xf]
    %v447 = vld [vmem:[%s3 + $0x114] sm:$0xf]
    %v448 = vld [vmem:[%s3 + $0x134] sm:$0xf]
    %v449 = vld [vmem:[%s3 + $0x154] sm:$0xf]
    %v450 = vld [vmem:[%s3 + $0x174] sm:$0xf]
    %v451 = vld [vmem:[%s3 + $0x194] sm:$0xf]
    %v452 = vld [vmem:[%s3 + $0x1b4] sm:$0xf]
    %v453 = vld [vmem:[%s3 + $0x1d4] sm:$0xf]
    %v454 = vld [vmem:[%s3 + $0x1f4] sm:$0xf]
    %v471 = vunpack.c.l.b16 %v439
    %v472 = vunpack.c.l.b16 %v440
    %v473 = vunpack.c.l.b16 %v441
    %v474 = vunpack.c.l.b16 %v442
    %v475 = vunpack.c.l.b16 %v443
    %v476 = vunpack.c.l.b16 %v444
    %v477 = vunpack.c.l.b16 %v445
    %v478 = vunpack.c.l.b16 %v446
    %v479 = vunpack.c.l.b16 %v447
    %v480 = vunpack.c.l.b16 %v448
    %v481 = vunpack.c.l.b16 %v449
    %v482 = vunpack.c.l.b16 %v450
    %v483 = vunpack.c.l.b16 %v451
    %v484 = vunpack.c.l.b16 %v452
    %v485 = vunpack.c.l.b16 %v453
    %v486 = vunpack.c.l.b16 %v454
    %v487 = vpack.c.b16 %v472, %v471
    %v488 = vpack.c.b16 %v474, %v473
    %v489 = vpack.c.b16 %v476, %v475
    %v490 = vpack.c.b16 %v478, %v477
    %v491 = vpack.c.b16 %v480, %v479
    %v492 = vpack.c.b16 %v482, %v481
    %v493 = vpack.c.b16 %v484, %v483
    %v494 = vpack.c.b16 %v486, %v485
    %503 = vmatpush.bf16.msra.mxu0 %v494
    %504 = vmatpush.bf16.msra.mxu0 %v493
    %505 = vmatpush.bf16.msra.mxu0 %v492
    %506 = vmatpush.bf16.msra.mxu0 %v491
    %507 = vmatpush.bf16.msra.mxu0 %v490
    %508 = vmatpush.bf16.msra.mxu0 %v489
    %509 = vmatpush.bf16.msra.mxu0 %v488
    %510 = vmatpush.bf16.msra.mxu0 %v487
    %511 = vmatmul.bf16.gmra.mxu0 %v438
    %v512 = vpop.f32.mrf.mxu0
    %v513 = vadd.f32 0.0, %v512
    %v514 = vpop.f32.mrf.mxu0
    %515 = vdwg.mxu0
    %v532 = vunpack.c.l.b16 %v422
    %v533 = vunpack.c.l.b16 %v423
    %v534 = vunpack.c.l.b16 %v424
    %v535 = vunpack.c.l.b16 %v425
    %v536 = vunpack.c.l.b16 %v426
    %v537 = vunpack.c.l.b16 %v427
    %v538 = vunpack.c.l.b16 %v428
    %v539 = vunpack.c.l.b16 %v429
    %v540 = vunpack.c.l.b16 %v430
    %v541 = vunpack.c.l.b16 %v431
    %v542 = vunpack.c.l.b16 %v432
    %v543 = vunpack.c.l.b16 %v433
    %v544 = vunpack.c.l.b16 %v434
    %v545 = vunpack.c.l.b16 %v435
    %v546 = vunpack.c.l.b16 %v436
    %v547 = vunpack.c.l.b16 %v437
    %v548 = vpack.c.b16 %v533, %v532
    %v549 = vpack.c.b16 %v535, %v534
    %v550 = vpack.c.b16 %v537, %v536
    %v551 = vpack.c.b16 %v539, %v538
    %v552 = vpack.c.b16 %v541, %v540
    %v553 = vpack.c.b16 %v543, %v542
    %v554 = vpack.c.b16 %v545, %v544
    %v555 = vpack.c.b16 %v547, %v546
    %564 = vmatpush.bf16.msra.mxu0 %v555
    %565 = vmatpush.bf16.msra.mxu0 %v554
    %566 = vmatpush.bf16.msra.mxu0 %v553
    %567 = vmatpush.bf16.msra.mxu0 %v552
    %568 = vmatpush.bf16.msra.mxu0 %v551
    %569 = vmatpush.bf16.msra.mxu0 %v550
    %570 = vmatpush.bf16.msra.mxu0 %v549
    %571 = vmatpush.bf16.msra.mxu0 %v548
    %572 = vmatmul.bf16.gmra.mxu0 %v421
    %v573 = vpop.f32.mrf.mxu0
    %v574 = vadd.f32 %v513, %v573
    %v575 = vpop.f32.mrf.mxu0
    %576 = vdwg.mxu0
    %v577 = vld [vmem:[%s4 + $0x8] sm:$0x1]
    %v578 = vperm.slane %v577, 0
    %v579 = vadd.f32 %v574, %v578
    %v580 = vld [vmem:[%s4 + $0x9] sm:$0x1]
    %v581 = vld [vmem:[%s4 + $0xa] sm:$0x1]
    %v582 = vmul.f32 %v579, %v29
    %583 = vadd.xlane.f32.xlu0 %v582
    %v584 = vpop.xlane.xlu0 %583
    %v585 = vmul.f32 %v584, 0.03125
    %v586 = vsub.f32 %v579, %v585
    %v587 = vmul.f32 %v586, %v29
    %v588 = vmul.f32 %v587, %v587
    %589 = vadd.xlane.f32.xlu0 %v588
    %v590 = vpop.xlane.xlu0 %589
    %v591 = vmul.f32 %v590, 0.03125
    %v592 = vadd.f32 %v591, 1e-05
    %v593 = vrsqrt.pop %v592
    %v594 = vmul.f32 %v593, %v592
    %v595 = vmul.f32 %v594, %v593
    %v596 = vmul.f32 0.5, %v595
    %v597 = vsub.f32 1.5, %v596
    %v598 = vmul.f32 %v593, %v597
    %vm599 = vweird.f32 %v592
    %vm600 = vweird.f32 %v593
    %vm601 = vmor %vm599, %vm600
    %v602 = vsel %vm601, %v593, %v598
    %v603 = vmul.f32 %v587, %v602
    %v604 = vperm.slane %v580, 0
    %v605 = vmul.f32 %v603, %v604
    %v606 = vperm.slane %v581, 0
    %v607 = vadd.f32 %v605, %v606
    %v608 = vpack.c.bf16 %v607, %v607
    %v609 = vld [vmem:[%s3 + $0x18] sm:$0xff]
    %v610 = vld [vmem:[%s3 + $0x38] sm:$0xff]
    %v611 = vld [vmem:[%s3 + $0x58] sm:$0xff]
    %v612 = vld [vmem:[%s3 + $0x78] sm:$0xff]
    %v613 = vld [vmem:[%s3 + $0x98] sm:$0xff]
    %v614 = vld [vmem:[%s3 + $0xb8] sm:$0xff]
    %v615 = vld [vmem:[%s3 + $0xd8] sm:$0xff]
    %v616 = vld [vmem:[%s3 + $0xf8] sm:$0xff]
    %v617 = vld [vmem:[%s3 + $0x118] sm:$0xff]
    %v618 = vld [vmem:[%s3 + $0x138] sm:$0xff]
    %v619 = vld [vmem:[%s3 + $0x158] sm:$0xff]
    %v620 = vld [vmem:[%s3 + $0x178] sm:$0xff]
    %v621 = vld [vmem:[%s3 + $0x198] sm:$0xff]
    %v622 = vld [vmem:[%s3 + $0x1b8] sm:$0xff]
    %v623 = vld [vmem:[%s3 + $0x1d8] sm:$0xff]
    %v624 = vld [vmem:[%s3 + $0x1f8] sm:$0xff]
    %v641 = vunpack.c.l.b16 %v609
    %v642 = vunpack.c.h.b16 %v609
    %v643 = vunpack.c.l.b16 %v610
    %v644 = vunpack.c.h.b16 %v610
    %v645 = vunpack.c.l.b16 %v611
    %v646 = vunpack.c.h.b16 %v611
    %v647 = vunpack.c.l.b16 %v612
    %v648 = vunpack.c.h.b16 %v612
    %v649 = vunpack.c.l.b16 %v613
    %v650 = vunpack.c.h.b16 %v613
    %v651 = vunpack.c.l.b16 %v614
    %v652 = vunpack.c.h.b16 %v614
    %v653 = vunpack.c.l.b16 %v615
    %v654 = vunpack.c.h.b16 %v615
    %v655 = vunpack.c.l.b16 %v616
    %v656 = vunpack.c.h.b16 %v616
    %v657 = vunpack.c.l.b16 %v617
    %v658 = vunpack.c.h.b16 %v617
    %v659 = vunpack.c.l.b16 %v618
    %v660 = vunpack.c.h.b16 %v618
    %v661 = vunpack.c.l.b16 %v619
    %v662 = vunpack.c.h.b16 %v619
    %v663 = vunpack.c.l.b16 %v620
    %v664 = vunpack.c.h.b16 %v620
    %v665 = vunpack.c.l.b16 %v621
    %v666 = vunpack.c.h.b16 %v621
    %v667 = vunpack.c.l.b16 %v622
    %v668 = vunpack.c.h.b16 %v622
    %v669 = vunpack.c.l.b16 %v623
    %v670 = vunpack.c.h.b16 %v623
    %v671 = vunpack.c.l.b16 %v624
    %v672 = vunpack.c.h.b16 %v624
    %v673 = vpack.c.b16 %v643, %v641
    %v674 = vpack.c.b16 %v644, %v642
    %v675 = vpack.c.b16 %v647, %v645
    %v676 = vpack.c.b16 %v648, %v646
    %v677 = vpack.c.b16 %v651, %v649
    %v678 = vpack.c.b16 %v652, %v650
    %v679 = vpack.c.b16 %v655, %v653
    %v680 = vpack.c.b16 %v656, %v654
    %v681 = vpack.c.b16 %v659, %v657
    %v682 = vpack.c.b16 %v660, %v658
    %v683 = vpack.c.b16 %v663, %v661
    %v684 = vpack.c.b16 %v664, %v662
    %v685 = vpack.c.b16 %v667, %v665
    %v686 = vpack.c.b16 %v668, %v666
    %v687 = vpack.c.b16 %v671, %v669
    %v688 = vpack.c.b16 %v672, %v670
    %705 = vmatpush.bf16.msra.mxu0 %v687
    %706 = vmatpush.bf16.msra.mxu0 %v685
    %707 = vmatpush.bf16.msra.mxu0 %v683
    %708 = vmatpush.bf16.msra.mxu0 %v681
    %709 = vmatpush.bf16.msra.mxu0 %v679
    %710 = vmatpush.bf16.msra.mxu0 %v677
    %711 = vmatpush.bf16.msra.mxu0 %v675
    %712 = vmatpush.bf16.msra.mxu0 %v673
    %713 = vmatmul.bf16.gmra.mxu0 %v608
    %v714 = vpop.f32.mrf.mxu0
    %v715 = vadd.f32 0.0, %v714
    %v716 = vpop.f32.mrf.mxu0
    %717 = vdwg.mxu0
    %718 = vmatpush.bf16.msra.mxu0 %v688
    %719 = vmatpush.bf16.msra.mxu0 %v686
    %720 = vmatpush.bf16.msra.mxu0 %v684
    %721 = vmatpush.bf16.msra.mxu0 %v682
    %722 = vmatpush.bf16.msra.mxu0 %v680
    %723 = vmatpush.bf16.msra.mxu0 %v678
    %724 = vmatpush.bf16.msra.mxu0 %v676
    %725 = vmatpush.bf16.msra.mxu0 %v674
    %726 = vmatmul.bf16.gmra.mxu0 %v608
    %v727 = vpop.f32.mrf.mxu0
    %v728 = vadd.f32 0.0, %v727
    %v729 = vpop.f32.mrf.mxu0
    %730 = vdwg.mxu0
    %v731 = vpack.c.bf16 %v728, %v715
    %v732 = vld [vmem:[%s4 + $0xb] sm:$0x1]
    %v733 = vperm.slane %v732, 0
    %v735 = vsel %vm162, %v731, 0
    %737 = vmatpush.bf16.msra.mxu0 0
    %738 = vmatpush.bf16.msra.mxu0 0
    %739 = vmatpush.bf16.msra.mxu0 0
    %740 = vmatpush.bf16.msra.mxu0 0
    %741 = vmatpush.bf16.msra.mxu0 0
    %742 = vmatpush.bf16.msra.mxu0 0
    %743 = vmatpush.bf16.msra.mxu0 0
    %744 = vmatpush.bf16.msra.mxu0 %v735
    %745 = vmatmul.bf16.gmra.mxu0 %v160
    %v746 = vpop.f32.mrf.mxu0
    %v747 = vadd.f32 %v733, %v746
    %v748 = vpop.f32.mrf.mxu0
    %749 = vdwg.mxu0
    %v750 = vmax.f32 %v747, 0.0
    %v751 = vld [vmem:[%s4 + $0xc] sm:$0x1]
    %v752 = vperm.slane %v751, 0
    %v754 = vunpack.c.h.b16 %v731
    %v755 = vpack.c.b16 %v754, %v754
    %v757 = vsel %vm162, %v755, 0
    %759 = vmatpush.bf16.msra.mxu0 0
    %760 = vmatpush.bf16.msra.mxu0 0
    %761 = vmatpush.bf16.msra.mxu0 0
    %762 = vmatpush.bf16.msra.mxu0 0
    %763 = vmatpush.bf16.msra.mxu0 0
    %764 = vmatpush.bf16.msra.mxu0 0
    %765 = vmatpush.bf16.msra.mxu0 0
    %766 = vmatpush.bf16.msra.mxu0 %v757
    %767 = vmatmul.bf16.gmra.mxu0 %v186
    %v768 = vpop.f32.mrf.mxu0
    %v769 = vadd.f32 %v752, %v768
    %v770 = vpop.f32.mrf.mxu0
    %771 = vdwg.mxu0
    %v772 = vmax.f32 %v769, 0.0
    %v773 = vpack.c.bf16 %v750, %v750
    %v774 = vld [vmem:[%s5] sm:$0xf]
    %v775 = vld [vmem:[%s5 + $0x4] sm:$0xf]
    %v776 = vld [vmem:[%s5 + $0x8] sm:$0xf]
    %v777 = vld [vmem:[%s5 + $0xc] sm:$0xf]
    %v778 = vld [vmem:[%s5 + $0x10] sm:$0xf]
    %v779 = vld [vmem:[%s5 + $0x14] sm:$0xf]
    %v780 = vld [vmem:[%s5 + $0x18] sm:$0xf]
    %v781 = vld [vmem:[%s5 + $0x1c] sm:$0xf]
    %v782 = vld [vmem:[%s5 + $0x20] sm:$0xf]
    %v783 = vld [vmem:[%s5 + $0x24] sm:$0xf]
    %v784 = vld [vmem:[%s5 + $0x28] sm:$0xf]
    %v785 = vld [vmem:[%s5 + $0x2c] sm:$0xf]
    %v786 = vld [vmem:[%s5 + $0x30] sm:$0xf]
    %v787 = vld [vmem:[%s5 + $0x34] sm:$0xf]
    %v788 = vld [vmem:[%s5 + $0x38] sm:$0xf]
    %v789 = vld [vmem:[%s5 + $0x3c] sm:$0xf]
    %v806 = vunpack.c.l.b16 %v774
    %v807 = vunpack.c.l.b16 %v775
    %v808 = vunpack.c.l.b16 %v776
    %v809 = vunpack.c.l.b16 %v777
    %v810 = vunpack.c.l.b16 %v778
    %v811 = vunpack.c.l.b16 %v779
    %v812 = vunpack.c.l.b16 %v780
    %v813 = vunpack.c.l.b16 %v781
    %v814 = vunpack.c.l.b16 %v782
    %v815 = vunpack.c.l.b16 %v783
    %v816 = vunpack.c.l.b16 %v784
    %v817 = vunpack.c.l.b16 %v785
    %v818 = vunpack.c.l.b16 %v786
    %v819 = vunpack.c.l.b16 %v787
    %v820 = vunpack.c.l.b16 %v788
    %v821 = vunpack.c.l.b16 %v789
    %v822 = vpack.c.b16 %v807, %v806
    %v823 = vpack.c.b16 %v809, %v808
    %v824 = vpack.c.b16 %v811, %v810
    %v825 = vpack.c.b16 %v813, %v812
    %v826 = vpack.c.b16 %v815, %v814
    %v827 = vpack.c.b16 %v817, %v816
    %v828 = vpack.c.b16 %v819, %v818
    %v829 = vpack.c.b16 %v821, %v820
    %838 = vmatpush.bf16.msra.mxu0 %v829
    %839 = vmatpush.bf16.msra.mxu0 %v828
    %840 = vmatpush.bf16.msra.mxu0 %v827
    %841 = vmatpush.bf16.msra.mxu0 %v826
    %842 = vmatpush.bf16.msra.mxu0 %v825
    %843 = vmatpush.bf16.msra.mxu0 %v824
    %844 = vmatpush.bf16.msra.mxu0 %v823
    %845 = vmatpush.bf16.msra.mxu0 %v822
    %846 = vmatmul.bf16.gmra.mxu0 %v773
    %v847 = vpop.f32.mrf.mxu0
    %v848 = vadd.f32 0.0, %v847
    %v849 = vpop.f32.mrf.mxu0
    %850 = vdwg.mxu0
    %v851 = vpack.c.bf16 %v772, %v772
    %852 = vmatpush.bf16.msra.mxu0 %v829
    %853 = vmatpush.bf16.msra.mxu0 %v828
    %854 = vmatpush.bf16.msra.mxu0 %v827
    %855 = vmatpush.bf16.msra.mxu0 %v826
    %856 = vmatpush.bf16.msra.mxu0 %v825
    %857 = vmatpush.bf16.msra.mxu0 %v824
    %858 = vmatpush.bf16.msra.mxu0 %v823
    %859 = vmatpush.bf16.msra.mxu0 %v822
    %860 = vmatmul.bf16.gmra.mxu0 %v851
    %v861 = vpop.f32.mrf.mxu0
    %v862 = vadd.f32 0.0, %v861
    %v863 = vpop.f32.mrf.mxu0
    %864 = vdwg.mxu0
    %v865 = vld [vmem:[%s4 + $0xd] sm:$0x1]
    %v866 = vperm.slane %v865, 0
    %v867 = vadd.f32 %v848, %v866
    %v868 = vxor.u32 %v867, 2147483648
    %v869 = vmul.f32 %v868, 1.442695
    %v870 = vpow.pop %v869
    %v871 = vadd.f32 %v870, 1.0
    %v872 = vrcp.pop %v871
    %v873 = vmul.f32 %v871, %v872
    %v874 = vsub.f32 1.0, %v873
    %v875 = vmul.f32 %v872, %v874
    %v876 = vadd.f32 %v872, %v875
    %vm877 = vweird.f32 %v871
    %vm878 = vweird.f32 %v872
    %vm879 = vmor %vm877, %vm878
    %v880 = vsel %vm879, %v872, %v876
    %v881 = vand.u32 2147483647, %v871
    %vm882 = vcmp.eq.f32.partialorder %v881, 8.507059e+37
    %v883 = vand.u32 %v871, 2147483648
    %v884 = vor.u32 1.1754944e-38, %v883
    %v885 = vsel %vm882, %v884, %v880
    %v886 = vmul.f32 1.0, %v885
    %v887 = vadd.f32 %v862, %v866
    %v888 = vxor.u32 %v887, 2147483648
    %v889 = vmul.f32 %v888, 1.442695
    %v890 = vpow.pop %v889
    %v891 = vadd.f32 %v890, 1.0
    %v892 = vrcp.pop %v891
    %v893 = vmul.f32 %v891, %v892
    %v894 = vsub.f32 1.0, %v893
    %v895 = vmul.f32 %v892, %v894
    %v896 = vadd.f32 %v892, %v895
    %vm897 = vweird.f32 %v891
    %vm898 = vweird.f32 %v892
    %vm899 = vmor %vm897, %vm898
    %v900 = vsel %vm899, %v892, %v896
    %v901 = vand.u32 2147483647, %v891
    %vm902 = vcmp.eq.f32.partialorder %v901, 8.507059e+37
    %v903 = vand.u32 %v891, 2147483648
    %v904 = vor.u32 1.1754944e-38, %v903
    %v905 = vsel %vm902, %v904, %v900
    %v906 = vmul.f32 1.0, %v905
    %908 = vrot.lane.b32.xlu0 %v906, 127
    %v909 = vpop.permute.xlu0 %908
    %v911 = vadd.f32 %v886, %v909
    %v912 = vrcp.pop %v911
    %v913 = vmul.f32 %v911, %v912
    %v914 = vsub.f32 1.0, %v913
    %v915 = vmul.f32 %v912, %v914
    %v916 = vadd.f32 %v912, %v915
    %vm917 = vweird.f32 %v911
    %vm918 = vweird.f32 %v912
    %vm919 = vmor %vm917, %vm918
    %v920 = vsel %vm919, %v912, %v916
    %v921 = vand.u32 2147483647, %v911
    %vm922 = vcmp.eq.f32.partialorder %v921, 8.507059e+37
    %v923 = vand.u32 %v911, 2147483648
    %v924 = vor.u32 1.1754944e-38, %v923
    %v925 = vsel %vm922, %v924, %v920
    %v926 = vmul.f32 %v886, %v925
    %928 = vset.pattern.permute.xlu0 0
    %929 = vperm.xlu0 %928, %v926
    %v930 = vpop.permute.xlu0 %929
    %v932 = vmul.f32 %v930, %v750
    %v933 = vsub.f32 1.0, %v926
    %935 = vset.pattern.permute.xlu0 0
    %936 = vperm.xlu0 %935, %v933
    %v937 = vpop.permute.xlu0 %936
    %v939 = vmul.f32 %v937, %v772
    %v940 = vadd.f32 %v932, %v939
    %941 = vst [vmem:[#allocation2] sm:$0xff] %v940
    // Predicated region
    $region26: #{dualg_forward.1} parent=1 // pred_check
      _
    $region27: #{dualg_forward.1} parent=1 // pred_check_branch
      %943 = sbr.rel (0) target = $region29
    $region28: #{dualg_forward.1} parent=1 // pred_region
      %945 = vsyncadd [#allocation3], 0
      %s947 = sshll.u32 [#allocation2], 4
      %s948 = int_to_ptr.vmem [resolvable:$true] %s947
      %s949 = sshll.u32 %s6, 4
      %s950 = int_to_ptr.hbm [resolvable:$true] %s949
      %952 = dma.vmem_to_hbm [thread:$0]  %s948, 128, %s950, [#allocation3]
    $region29: #{dualg_forward.1} parent=1 // pred_fallthru
      _
    // Predicated region
    $region30: #{dualg_forward.1} parent=1 // pred_check
      _
    $region31: #{dualg_forward.1} parent=1 // pred_check_branch
      %954 = sbr.rel (0) target = $region33
    $region32: #{dualg_forward.1} parent=1 // pred_region
      %956 = dma.done [#allocation3], 128
    $region33: #{dualg_forward.1} parent=1 // pred_fallthru
      _
    %957 = vsyncpa [#allocation3], 1

</llo_original>
